<compile_context>
chip_gen: v5e
topology: v5e:2x2
jax: 0.10.0
libtpu: 0.0.40
codegen_flags: <defaults>
</compile_context>

<pallas_src>
import jax
import jax.numpy as jnp
from jax.experimental import pallas as pl
from jax.experimental.pallas import tpu as pltpu

IN_F = 3        # input features
HID = 10        # collapsed hidden width (fc3 output)
OUT_F = 2       # output features
LANE = 128      # lane granularity for the batch axis
TM_MAX = 16384  # max batch-tile (lanes) per grid step; VMEM-safe on v5e/v6e/v7x


def _mlp_kernel(x_ref, wc_ref, bc_ref, w4_ref, b4_ref, o_ref):
    """x_ref: [3, tm] VMEM; o_ref: [2, tm] VMEM; weights/biases in SMEM.

    Computes o = W4t.T @ tanh(Wc.T @ x + bc) + b4 row-wise using
    scalar-broadcast FMAs on the VPU (MXU left idle on purpose).
    """
    x0 = x_ref[0:1, :]
    x1 = x_ref[1:2, :]
    x2 = x_ref[2:3, :]
    o0 = jnp.zeros_like(x0)
    o1 = jnp.zeros_like(x0)
    for j in range(HID):  # unrolled at trace time (10 iterations)
        h = jnp.tanh(wc_ref[0, j] * x0 + wc_ref[1, j] * x1 + wc_ref[2, j] * x2
                     + bc_ref[j])
        o0 = o0 + w4_ref[j, 0] * h
        o1 = o1 + w4_ref[j, 1] * h
    o_ref[0:1, :] = o0 + b4_ref[0]
    o_ref[1:2, :] = o1 + b4_ref[1]


def prepare_params(params):
    """One-time prep (hoisted out of the forward pass).

    fc1..fc3 have no activation between them, so they collapse into a single
    [3, 10] linear (done at HIGHEST precision so the kernel's exact-f32 VPU
    math matches the layer-by-layer reference):
        Wc = W1.T @ W2.T @ W3.T
        bc = (b1 @ W2.T + b2) @ W3.T + b3
    """
    hp = jax.lax.Precision.HIGHEST
    w1, b1 = params["fc1"]
    w2, b2 = params["fc2"]
    w3, b3 = params["fc3"]
    w4, b4 = params["fc4"]
    wc = jnp.dot(jnp.dot(w1.T, w2.T, precision=hp), w3.T, precision=hp)
    bc = jnp.dot(jnp.dot(b1, w2.T, precision=hp) + b2, w3.T, precision=hp) + b3
    return (wc.astype(jnp.float32),      # [3, 10]
            bc.astype(jnp.float32),      # [10]
            w4.T.astype(jnp.float32),    # [10, 2]
            b4.astype(jnp.float32))      # [2]


def _round_up(a, b):
    return ((a + b - 1) // b) * b


def _pick_tile(n):
    """Batch tile (lanes): multiple of 128, capped at TM_MAX, and chosen so the
    grid has >= 2 steps whenever n allows it (keeps both v7x TensorCores busy
    through the "parallel" grid axis; harmless on single-TC v5e/v6e)."""
    half = _round_up(max(pl.cdiv(n, 2), 1), LANE)
    return max(LANE, min(TM_MAX, half))


@jax.jit
def net_forward(x, wc, bc, w4t, b4):
    """x: [N, 3] float32 -> [N, 2] float32 (same semantics as Net.forward)."""
    n = x.shape[0]
    tm = _pick_tile(n)
    x_t = x.astype(jnp.float32).T          # [3, N]: feature-major, lane-dense

    smem = pl.BlockSpec(memory_space=pltpu.MemorySpace.SMEM)
    out_t = pl.pallas_call(
        _mlp_kernel,
        out_shape=jax.ShapeDtypeStruct((OUT_F, n), jnp.float32),
        grid=(pl.cdiv(n, tm),),            # ragged final block handled by Pallas
        in_specs=[
            pl.BlockSpec((IN_F, tm), lambda i: (0, i)),   # x tile  [3, tm]
            smem,                                         # Wc      [3, 10]
            smem,                                         # bc      [10]
            smem,                                         # W4.T    [10, 2]
            smem,                                         # b4      [2]
        ],
        out_specs=pl.BlockSpec((OUT_F, tm), lambda i: (0, i)),
        compiler_params=pltpu.CompilerParams(
            dimension_semantics=("parallel",),
            vmem_limit_bytes=32 * 1024 * 1024),
    )(x_t, wc, bc, w4t, b4)

    return out_t.T                          # [N, 2]


def init_params(key):
    """Deterministic synthetic parameters with the shapes nn.Linear implies
    (PyTorch layout: W is [out, in], b is [out])."""
    dims = [(3, 80), (80, 40), (40, 10), (10, 2)]
    names = ("fc1", "fc2", "fc3", "fc4")
    params = {}
    for name, (fan_in, fan_out) in zip(names, dims):
        key, kw, kb = jax.random.split(key, 3)
        bound = 1.0 / jnp.sqrt(fan_in)
        w = jax.random.uniform(kw, (fan_out, fan_in), jnp.float32, -bound, bound)
        b = jax.random.uniform(kb, (fan_out,), jnp.float32, -bound, bound)
        params[name] = (w, b)
    return params


def net_forward_reference(x, params):
    """Pure-JAX reference matching the PyTorch forward exactly."""
    hp = jax.lax.Precision.HIGHEST
    h = x
    for i, name in enumerate(("fc1", "fc2", "fc3", "fc4")):
        w, b = params[name]
        if i == 3:
            h = jnp.tanh(h)
        h = jnp.dot(h, w.T, precision=hp) + b
    return h


if __name__ == "__main__":
    key = jax.random.PRNGKey(0)
    key, kx, kx2, kx3 = jax.random.split(key, 4)
    params = init_params(key)
    prepared = prepare_params(params)   # one-time weight prep (collapse fc1-3)

    # Small batch consistent with the module: 8 points, 3 features each.
    x = jax.random.normal(kx, (8, 3), jnp.float32)
    out = jax.block_until_ready(net_forward(x, *prepared))
    ref = net_forward_reference(x, params)
    assert out.shape == (8, 2), out.shape
    assert jnp.allclose(out, ref, atol=1e-4, rtol=1e-4), (
        "Pallas output mismatch vs reference (n=8)")

    # Non-tile-aligned batch: exercises the 2-step "parallel" grid and the
    # masked ragged final block (no wrapper pad / slice).
    x2 = jax.random.normal(kx2, (2500, 3), jnp.float32)
    out2 = jax.block_until_ready(net_forward(x2, *prepared))
    ref2 = net_forward_reference(x2, params)
    assert out2.shape == (2500, 2), out2.shape
    assert jnp.allclose(out2, ref2, atol=1e-4, rtol=1e-4), (
        "Pallas output mismatch vs reference (n=2500)")

    # Larger batch: exercises the TM_MAX-capped multi-step path.
    x3 = jax.random.normal(kx3, (50000, 3), jnp.float32)
    out3 = jax.block_until_ready(net_forward(x3, *prepared))
    ref3 = net_forward_reference(x3, params)
    assert out3.shape == (50000, 2), out3.shape
    assert jnp.allclose(out3, ref3, atol=1e-4, rtol=1e-4), (
        "Pallas output mismatch vs reference (n=50000)")

    print("KERNEL_OK")
</pallas_src>

<mosaic_0001>
module attributes {stable_mosaic.version = 11 : i64} {
  func.func @_mlp_kernel(%arg0: i32, %arg1: memref<3x128xf32, #tpu.memory_space<vmem>>, %arg2: memref<3x10xf32, #tpu.memory_space<smem>>, %arg3: memref<10xf32, #tpu.memory_space<smem>>, %arg4: memref<10x2xf32, #tpu.memory_space<smem>>, %arg5: memref<2xf32, #tpu.memory_space<smem>>, %arg6: memref<2x128xf32, #tpu.memory_space<vmem>>) attributes {dimension_semantics = [#tpu.dimension_semantics<parallel>], iteration_bounds = array<i64: 1>, scalar_prefetch = 0 : i64, scratch_operands = 0 : i64, tpu.core_type = #tpu.core_type<tc>, window_params = [{transform_indices = @transform_0, window_bounds = array<i64: 3, 128>}, {transform_indices = @transform_1, window_bounds = array<i64: 3, 10>}, {transform_indices = @transform_2, window_bounds = array<i64: 10>}, {transform_indices = @transform_3, window_bounds = array<i64: 10, 2>}, {transform_indices = @transform_4, window_bounds = array<i64: 2>}, {transform_indices = @transform_5, window_bounds = array<i64: 2, 128>}]} {
    %c0 = arith.constant 0 : index
    %c0_0 = arith.constant 0 : index
    %0 = vector.load %arg1[%c0, %c0_0] : memref<3x128xf32, #tpu.memory_space<vmem>>, vector<1x128xf32>
    %c1 = arith.constant 1 : index
    %c0_1 = arith.constant 0 : index
    %1 = vector.load %arg1[%c1, %c0_1] : memref<3x128xf32, #tpu.memory_space<vmem>>, vector<1x128xf32>
    %c2 = arith.constant 2 : index
    %c0_2 = arith.constant 0 : index
    %2 = vector.load %arg1[%c2, %c0_2] : memref<3x128xf32, #tpu.memory_space<vmem>>, vector<1x128xf32>
    %cst = arith.constant 0.000000e+00 : f32
    %3 = vector.broadcast %cst : f32 to vector<1x128xf32>
    %cst_3 = arith.constant 0.000000e+00 : f32
    %4 = vector.broadcast %cst_3 : f32 to vector<1x128xf32>
    %c0_4 = arith.constant 0 : index
    %c0_5 = arith.constant 0 : index
    %5 = memref.load %arg2[%c0_4, %c0_5] : memref<3x10xf32, #tpu.memory_space<smem>>
    %6 = vector.broadcast %5 : f32 to vector<1x128xf32>
    %7 = arith.mulf %6, %0 : vector<1x128xf32>
    %c1_6 = arith.constant 1 : index
    %c0_7 = arith.constant 0 : index
    %8 = memref.load %arg2[%c1_6, %c0_7] : memref<3x10xf32, #tpu.memory_space<smem>>
    %9 = vector.broadcast %8 : f32 to vector<1x128xf32>
    %10 = arith.mulf %9, %1 : vector<1x128xf32>
    %11 = arith.addf %7, %10 : vector<1x128xf32>
    %c2_8 = arith.constant 2 : index
    %c0_9 = arith.constant 0 : index
    %12 = memref.load %arg2[%c2_8, %c0_9] : memref<3x10xf32, #tpu.memory_space<smem>>
    %13 = vector.broadcast %12 : f32 to vector<1x128xf32>
    %14 = arith.mulf %13, %2 : vector<1x128xf32>
    %15 = arith.addf %11, %14 : vector<1x128xf32>
    %c0_10 = arith.constant 0 : index
    %16 = memref.load %arg3[%c0_10] : memref<10xf32, #tpu.memory_space<smem>>
    %17 = vector.broadcast %16 : f32 to vector<1x128xf32>
    %18 = arith.addf %15, %17 : vector<1x128xf32>
    %19 = math.tanh %18 : vector<1x128xf32>
    %c0_11 = arith.constant 0 : index
    %c0_12 = arith.constant 0 : index
    %20 = memref.load %arg4[%c0_11, %c0_12] : memref<10x2xf32, #tpu.memory_space<smem>>
    %21 = vector.broadcast %20 : f32 to vector<1x128xf32>
    %22 = arith.mulf %21, %19 : vector<1x128xf32>
    %23 = arith.addf %3, %22 : vector<1x128xf32>
    %c0_13 = arith.constant 0 : index
    %c1_14 = arith.constant 1 : index
    %24 = memref.load %arg4[%c0_13, %c1_14] : memref<10x2xf32, #tpu.memory_space<smem>>
    %25 = vector.broadcast %24 : f32 to vector<1x128xf32>
    %26 = arith.mulf %25, %19 : vector<1x128xf32>
    %27 = arith.addf %4, %26 : vector<1x128xf32>
    %c0_15 = arith.constant 0 : index
    %c1_16 = arith.constant 1 : index
    %28 = memref.load %arg2[%c0_15, %c1_16] : memref<3x10xf32, #tpu.memory_space<smem>>
    %29 = vector.broadcast %28 : f32 to vector<1x128xf32>
    %30 = arith.mulf %29, %0 : vector<1x128xf32>
    %c1_17 = arith.constant 1 : index
    %c1_18 = arith.constant 1 : index
    %31 = memref.load %arg2[%c1_17, %c1_18] : memref<3x10xf32, #tpu.memory_space<smem>>
    %32 = vector.broadcast %31 : f32 to vector<1x128xf32>
    %33 = arith.mulf %32, %1 : vector<1x128xf32>
    %34 = arith.addf %30, %33 : vector<1x128xf32>
    %c2_19 = arith.constant 2 : index
    %c1_20 = arith.constant 1 : index
    %35 = memref.load %arg2[%c2_19, %c1_20] : memref<3x10xf32, #tpu.memory_space<smem>>
    %36 = vector.broadcast %35 : f32 to vector<1x128xf32>
    %37 = arith.mulf %36, %2 : vector<1x128xf32>
    %38 = arith.addf %34, %37 : vector<1x128xf32>
    %c1_21 = arith.constant 1 : index
    %39 = memref.load %arg3[%c1_21] : memref<10xf32, #tpu.memory_space<smem>>
    %40 = vector.broadcast %39 : f32 to vector<1x128xf32>
    %41 = arith.addf %38, %40 : vector<1x128xf32>
    %42 = math.tanh %41 : vector<1x128xf32>
    %c1_22 = arith.constant 1 : index
    %c0_23 = arith.constant 0 : index
    %43 = memref.load %arg4[%c1_22, %c0_23] : memref<10x2xf32, #tpu.memory_space<smem>>
    %44 = vector.broadcast %43 : f32 to vector<1x128xf32>
    %45 = arith.mulf %44, %42 : vector<1x128xf32>
    %46 = arith.addf %23, %45 : vector<1x128xf32>
    %c1_24 = arith.constant 1 : index
    %c1_25 = arith.constant 1 : index
    %47 = memref.load %arg4[%c1_24, %c1_25] : memref<10x2xf32, #tpu.memory_space<smem>>
    %48 = vector.broadcast %47 : f32 to vector<1x128xf32>
    %49 = arith.mulf %48, %42 : vector<1x128xf32>
    %50 = arith.addf %27, %49 : vector<1x128xf32>
    %c0_26 = arith.constant 0 : index
    %c2_27 = arith.constant 2 : index
    %51 = memref.load %arg2[%c0_26, %c2_27] : memref<3x10xf32, #tpu.memory_space<smem>>
    %52 = vector.broadcast %51 : f32 to vector<1x128xf32>
    %53 = arith.mulf %52, %0 : vector<1x128xf32>
    %c1_28 = arith.constant 1 : index
    %c2_29 = arith.constant 2 : index
    %54 = memref.load %arg2[%c1_28, %c2_29] : memref<3x10xf32, #tpu.memory_space<smem>>
    %55 = vector.broadcast %54 : f32 to vector<1x128xf32>
    %56 = arith.mulf %55, %1 : vector<1x128xf32>
    %57 = arith.addf %53, %56 : vector<1x128xf32>
    %c2_30 = arith.constant 2 : index
    %c2_31 = arith.constant 2 : index
    %58 = memref.load %arg2[%c2_30, %c2_31] : memref<3x10xf32, #tpu.memory_space<smem>>
    %59 = vector.broadcast %58 : f32 to vector<1x128xf32>
    %60 = arith.mulf %59, %2 : vector<1x128xf32>
    %61 = arith.addf %57, %60 : vector<1x128xf32>
    %c2_32 = arith.constant 2 : index
    %62 = memref.load %arg3[%c2_32] : memref<10xf32, #tpu.memory_space<smem>>
    %63 = vector.broadcast %62 : f32 to vector<1x128xf32>
    %64 = arith.addf %61, %63 : vector<1x128xf32>
    %65 = math.tanh %64 : vector<1x128xf32>
    %c2_33 = arith.constant 2 : index
    %c0_34 = arith.constant 0 : index
    %66 = memref.load %arg4[%c2_33, %c0_34] : memref<10x2xf32, #tpu.memory_space<smem>>
    %67 = vector.broadcast %66 : f32 to vector<1x128xf32>
    %68 = arith.mulf %67, %65 : vector<1x128xf32>
    %69 = arith.addf %46, %68 : vector<1x128xf32>
    %c2_35 = arith.constant 2 : index
    %c1_36 = arith.constant 1 : index
    %70 = memref.load %arg4[%c2_35, %c1_36] : memref<10x2xf32, #tpu.memory_space<smem>>
    %71 = vector.broadcast %70 : f32 to vector<1x128xf32>
    %72 = arith.mulf %71, %65 : vector<1x128xf32>
    %73 = arith.addf %50, %72 : vector<1x128xf32>
    %c0_37 = arith.constant 0 : index
    %c3 = arith.constant 3 : index
    %74 = memref.load %arg2[%c0_37, %c3] : memref<3x10xf32, #tpu.memory_space<smem>>
    %75 = vector.broadcast %74 : f32 to vector<1x128xf32>
    %76 = arith.mulf %75, %0 : vector<1x128xf32>
    %c1_38 = arith.constant 1 : index
    %c3_39 = arith.constant 3 : index
    %77 = memref.load %arg2[%c1_38, %c3_39] : memref<3x10xf32, #tpu.memory_space<smem>>
    %78 = vector.broadcast %77 : f32 to vector<1x128xf32>
    %79 = arith.mulf %78, %1 : vector<1x128xf32>
    %80 = arith.addf %76, %79 : vector<1x128xf32>
    %c2_40 = arith.constant 2 : index
    %c3_41 = arith.constant 3 : index
    %81 = memref.load %arg2[%c2_40, %c3_41] : memref<3x10xf32, #tpu.memory_space<smem>>
    %82 = vector.broadcast %81 : f32 to vector<1x128xf32>
    %83 = arith.mulf %82, %2 : vector<1x128xf32>
    %84 = arith.addf %80, %83 : vector<1x128xf32>
    %c3_42 = arith.constant 3 : index
    %85 = memref.load %arg3[%c3_42] : memref<10xf32, #tpu.memory_space<smem>>
    %86 = vector.broadcast %85 : f32 to vector<1x128xf32>
    %87 = arith.addf %84, %86 : vector<1x128xf32>
    %88 = math.tanh %87 : vector<1x128xf32>
    %c3_43 = arith.constant 3 : index
    %c0_44 = arith.constant 0 : index
    %89 = memref.load %arg4[%c3_43, %c0_44] : memref<10x2xf32, #tpu.memory_space<smem>>
    %90 = vector.broadcast %89 : f32 to vector<1x128xf32>
    %91 = arith.mulf %90, %88 : vector<1x128xf32>
    %92 = arith.addf %69, %91 : vector<1x128xf32>
    %c3_45 = arith.constant 3 : index
    %c1_46 = arith.constant 1 : index
    %93 = memref.load %arg4[%c3_45, %c1_46] : memref<10x2xf32, #tpu.memory_space<smem>>
    %94 = vector.broadcast %93 : f32 to vector<1x128xf32>
    %95 = arith.mulf %94, %88 : vector<1x128xf32>
    %96 = arith.addf %73, %95 : vector<1x128xf32>
    %c0_47 = arith.constant 0 : index
    %c4 = arith.constant 4 : index
    %97 = memref.load %arg2[%c0_47, %c4] : memref<3x10xf32, #tpu.memory_space<smem>>
    %98 = vector.broadcast %97 : f32 to vector<1x128xf32>
    %99 = arith.mulf %98, %0 : vector<1x128xf32>
    %c1_48 = arith.constant 1 : index
    %c4_49 = arith.constant 4 : index
    %100 = memref.load %arg2[%c1_48, %c4_49] : memref<3x10xf32, #tpu.memory_space<smem>>
    %101 = vector.broadcast %100 : f32 to vector<1x128xf32>
    %102 = arith.mulf %101, %1 : vector<1x128xf32>
    %103 = arith.addf %99, %102 : vector<1x128xf32>
    %c2_50 = arith.constant 2 : index
    %c4_51 = arith.constant 4 : index
    %104 = memref.load %arg2[%c2_50, %c4_51] : memref<3x10xf32, #tpu.memory_space<smem>>
    %105 = vector.broadcast %104 : f32 to vector<1x128xf32>
    %106 = arith.mulf %105, %2 : vector<1x128xf32>
    %107 = arith.addf %103, %106 : vector<1x128xf32>
    %c4_52 = arith.constant 4 : index
    %108 = memref.load %arg3[%c4_52] : memref<10xf32, #tpu.memory_space<smem>>
    %109 = vector.broadcast %108 : f32 to vector<1x128xf32>
    %110 = arith.addf %107, %109 : vector<1x128xf32>
    %111 = math.tanh %110 : vector<1x128xf32>
    %c4_53 = arith.constant 4 : index
    %c0_54 = arith.constant 0 : index
    %112 = memref.load %arg4[%c4_53, %c0_54] : memref<10x2xf32, #tpu.memory_space<smem>>
    %113 = vector.broadcast %112 : f32 to vector<1x128xf32>
    %114 = arith.mulf %113, %111 : vector<1x128xf32>
    %115 = arith.addf %92, %114 : vector<1x128xf32>
    %c4_55 = arith.constant 4 : index
    %c1_56 = arith.constant 1 : index
    %116 = memref.load %arg4[%c4_55, %c1_56] : memref<10x2xf32, #tpu.memory_space<smem>>
    %117 = vector.broadcast %116 : f32 to vector<1x128xf32>
    %118 = arith.mulf %117, %111 : vector<1x128xf32>
    %119 = arith.addf %96, %118 : vector<1x128xf32>
    %c0_57 = arith.constant 0 : index
    %c5 = arith.constant 5 : index
    %120 = memref.load %arg2[%c0_57, %c5] : memref<3x10xf32, #tpu.memory_space<smem>>
    %121 = vector.broadcast %120 : f32 to vector<1x128xf32>
    %122 = arith.mulf %121, %0 : vector<1x128xf32>
    %c1_58 = arith.constant 1 : index
    %c5_59 = arith.constant 5 : index
    %123 = memref.load %arg2[%c1_58, %c5_59] : memref<3x10xf32, #tpu.memory_space<smem>>
    %124 = vector.broadcast %123 : f32 to vector<1x128xf32>
    %125 = arith.mulf %124, %1 : vector<1x128xf32>
    %126 = arith.addf %122, %125 : vector<1x128xf32>
    %c2_60 = arith.constant 2 : index
    %c5_61 = arith.constant 5 : index
    %127 = memref.load %arg2[%c2_60, %c5_61] : memref<3x10xf32, #tpu.memory_space<smem>>
    %128 = vector.broadcast %127 : f32 to vector<1x128xf32>
    %129 = arith.mulf %128, %2 : vector<1x128xf32>
    %130 = arith.addf %126, %129 : vector<1x128xf32>
    %c5_62 = arith.constant 5 : index
    %131 = memref.load %arg3[%c5_62] : memref<10xf32, #tpu.memory_space<smem>>
    %132 = vector.broadcast %131 : f32 to vector<1x128xf32>
    %133 = arith.addf %130, %132 : vector<1x128xf32>
    %134 = math.tanh %133 : vector<1x128xf32>
    %c5_63 = arith.constant 5 : index
    %c0_64 = arith.constant 0 : index
    %135 = memref.load %arg4[%c5_63, %c0_64] : memref<10x2xf32, #tpu.memory_space<smem>>
    %136 = vector.broadcast %135 : f32 to vector<1x128xf32>
    %137 = arith.mulf %136, %134 : vector<1x128xf32>
    %138 = arith.addf %115, %137 : vector<1x128xf32>
    %c5_65 = arith.constant 5 : index
    %c1_66 = arith.constant 1 : index
    %139 = memref.load %arg4[%c5_65, %c1_66] : memref<10x2xf32, #tpu.memory_space<smem>>
    %140 = vector.broadcast %139 : f32 to vector<1x128xf32>
    %141 = arith.mulf %140, %134 : vector<1x128xf32>
    %142 = arith.addf %119, %141 : vector<1x128xf32>
    %c0_67 = arith.constant 0 : index
    %c6 = arith.constant 6 : index
    %143 = memref.load %arg2[%c0_67, %c6] : memref<3x10xf32, #tpu.memory_space<smem>>
    %144 = vector.broadcast %143 : f32 to vector<1x128xf32>
    %145 = arith.mulf %144, %0 : vector<1x128xf32>
    %c1_68 = arith.constant 1 : index
    %c6_69 = arith.constant 6 : index
    %146 = memref.load %arg2[%c1_68, %c6_69] : memref<3x10xf32, #tpu.memory_space<smem>>
    %147 = vector.broadcast %146 : f32 to vector<1x128xf32>
    %148 = arith.mulf %147, %1 : vector<1x128xf32>
    %149 = arith.addf %145, %148 : vector<1x128xf32>
    %c2_70 = arith.constant 2 : index
    %c6_71 = arith.constant 6 : index
    %150 = memref.load %arg2[%c2_70, %c6_71] : memref<3x10xf32, #tpu.memory_space<smem>>
    %151 = vector.broadcast %150 : f32 to vector<1x128xf32>
    %152 = arith.mulf %151, %2 : vector<1x128xf32>
    %153 = arith.addf %149, %152 : vector<1x128xf32>
    %c6_72 = arith.constant 6 : index
    %154 = memref.load %arg3[%c6_72] : memref<10xf32, #tpu.memory_space<smem>>
    %155 = vector.broadcast %154 : f32 to vector<1x128xf32>
    %156 = arith.addf %153, %155 : vector<1x128xf32>
    %157 = math.tanh %156 : vector<1x128xf32>
    %c6_73 = arith.constant 6 : index
    %c0_74 = arith.constant 0 : index
    %158 = memref.load %arg4[%c6_73, %c0_74] : memref<10x2xf32, #tpu.memory_space<smem>>
    %159 = vector.broadcast %158 : f32 to vector<1x128xf32>
    %160 = arith.mulf %159, %157 : vector<1x128xf32>
    %161 = arith.addf %138, %160 : vector<1x128xf32>
    %c6_75 = arith.constant 6 : index
    %c1_76 = arith.constant 1 : index
    %162 = memref.load %arg4[%c6_75, %c1_76] : memref<10x2xf32, #tpu.memory_space<smem>>
    %163 = vector.broadcast %162 : f32 to vector<1x128xf32>
    %164 = arith.mulf %163, %157 : vector<1x128xf32>
    %165 = arith.addf %142, %164 : vector<1x128xf32>
    %c0_77 = arith.constant 0 : index
    %c7 = arith.constant 7 : index
    %166 = memref.load %arg2[%c0_77, %c7] : memref<3x10xf32, #tpu.memory_space<smem>>
    %167 = vector.broadcast %166 : f32 to vector<1x128xf32>
    %168 = arith.mulf %167, %0 : vector<1x128xf32>
    %c1_78 = arith.constant 1 : index
    %c7_79 = arith.constant 7 : index
    %169 = memref.load %arg2[%c1_78, %c7_79] : memref<3x10xf32, #tpu.memory_space<smem>>
    %170 = vector.broadcast %169 : f32 to vector<1x128xf32>
    %171 = arith.mulf %170, %1 : vector<1x128xf32>
    %172 = arith.addf %168, %171 : vector<1x128xf32>
    %c2_80 = arith.constant 2 : index
    %c7_81 = arith.constant 7 : index
    %173 = memref.load %arg2[%c2_80, %c7_81] : memref<3x10xf32, #tpu.memory_space<smem>>
    %174 = vector.broadcast %173 : f32 to vector<1x128xf32>
    %175 = arith.mulf %174, %2 : vector<1x128xf32>
    %176 = arith.addf %172, %175 : vector<1x128xf32>
    %c7_82 = arith.constant 7 : index
    %177 = memref.load %arg3[%c7_82] : memref<10xf32, #tpu.memory_space<smem>>
    %178 = vector.broadcast %177 : f32 to vector<1x128xf32>
    %179 = arith.addf %176, %178 : vector<1x128xf32>
    %180 = math.tanh %179 : vector<1x128xf32>
    %c7_83 = arith.constant 7 : index
    %c0_84 = arith.constant 0 : index
    %181 = memref.load %arg4[%c7_83, %c0_84] : memref<10x2xf32, #tpu.memory_space<smem>>
    %182 = vector.broadcast %181 : f32 to vector<1x128xf32>
    %183 = arith.mulf %182, %180 : vector<1x128xf32>
    %184 = arith.addf %161, %183 : vector<1x128xf32>
    %c7_85 = arith.constant 7 : index
    %c1_86 = arith.constant 1 : index
    %185 = memref.load %arg4[%c7_85, %c1_86] : memref<10x2xf32, #tpu.memory_space<smem>>
    %186 = vector.broadcast %185 : f32 to vector<1x128xf32>
    %187 = arith.mulf %186, %180 : vector<1x128xf32>
    %188 = arith.addf %165, %187 : vector<1x128xf32>
    %c0_87 = arith.constant 0 : index
    %c8 = arith.constant 8 : index
    %189 = memref.load %arg2[%c0_87, %c8] : memref<3x10xf32, #tpu.memory_space<smem>>
    %190 = vector.broadcast %189 : f32 to vector<1x128xf32>
    %191 = arith.mulf %190, %0 : vector<1x128xf32>
    %c1_88 = arith.constant 1 : index
    %c8_89 = arith.constant 8 : index
    %192 = memref.load %arg2[%c1_88, %c8_89] : memref<3x10xf32, #tpu.memory_space<smem>>
    %193 = vector.broadcast %192 : f32 to vector<1x128xf32>
    %194 = arith.mulf %193, %1 : vector<1x128xf32>
    %195 = arith.addf %191, %194 : vector<1x128xf32>
    %c2_90 = arith.constant 2 : index
    %c8_91 = arith.constant 8 : index
    %196 = memref.load %arg2[%c2_90, %c8_91] : memref<3x10xf32, #tpu.memory_space<smem>>
    %197 = vector.broadcast %196 : f32 to vector<1x128xf32>
    %198 = arith.mulf %197, %2 : vector<1x128xf32>
    %199 = arith.addf %195, %198 : vector<1x128xf32>
    %c8_92 = arith.constant 8 : index
    %200 = memref.load %arg3[%c8_92] : memref<10xf32, #tpu.memory_space<smem>>
    %201 = vector.broadcast %200 : f32 to vector<1x128xf32>
    %202 = arith.addf %199, %201 : vector<1x128xf32>
    %203 = math.tanh %202 : vector<1x128xf32>
    %c8_93 = arith.constant 8 : index
    %c0_94 = arith.constant 0 : index
    %204 = memref.load %arg4[%c8_93, %c0_94] : memref<10x2xf32, #tpu.memory_space<smem>>
    %205 = vector.broadcast %204 : f32 to vector<1x128xf32>
    %206 = arith.mulf %205, %203 : vector<1x128xf32>
    %207 = arith.addf %184, %206 : vector<1x128xf32>
    %c8_95 = arith.constant 8 : index
    %c1_96 = arith.constant 1 : index
    %208 = memref.load %arg4[%c8_95, %c1_96] : memref<10x2xf32, #tpu.memory_space<smem>>
    %209 = vector.broadcast %208 : f32 to vector<1x128xf32>
    %210 = arith.mulf %209, %203 : vector<1x128xf32>
    %211 = arith.addf %188, %210 : vector<1x128xf32>
    %c0_97 = arith.constant 0 : index
    %c9 = arith.constant 9 : index
    %212 = memref.load %arg2[%c0_97, %c9] : memref<3x10xf32, #tpu.memory_space<smem>>
    %213 = vector.broadcast %212 : f32 to vector<1x128xf32>
    %214 = arith.mulf %213, %0 : vector<1x128xf32>
    %c1_98 = arith.constant 1 : index
    %c9_99 = arith.constant 9 : index
    %215 = memref.load %arg2[%c1_98, %c9_99] : memref<3x10xf32, #tpu.memory_space<smem>>
    %216 = vector.broadcast %215 : f32 to vector<1x128xf32>
    %217 = arith.mulf %216, %1 : vector<1x128xf32>
    %218 = arith.addf %214, %217 : vector<1x128xf32>
    %c2_100 = arith.constant 2 : index
    %c9_101 = arith.constant 9 : index
    %219 = memref.load %arg2[%c2_100, %c9_101] : memref<3x10xf32, #tpu.memory_space<smem>>
    %220 = vector.broadcast %219 : f32 to vector<1x128xf32>
    %221 = arith.mulf %220, %2 : vector<1x128xf32>
    %222 = arith.addf %218, %221 : vector<1x128xf32>
    %c9_102 = arith.constant 9 : index
    %223 = memref.load %arg3[%c9_102] : memref<10xf32, #tpu.memory_space<smem>>
    %224 = vector.broadcast %223 : f32 to vector<1x128xf32>
    %225 = arith.addf %222, %224 : vector<1x128xf32>
    %226 = math.tanh %225 : vector<1x128xf32>
    %c9_103 = arith.constant 9 : index
    %c0_104 = arith.constant 0 : index
    %227 = memref.load %arg4[%c9_103, %c0_104] : memref<10x2xf32, #tpu.memory_space<smem>>
    %228 = vector.broadcast %227 : f32 to vector<1x128xf32>
    %229 = arith.mulf %228, %226 : vector<1x128xf32>
    %230 = arith.addf %207, %229 : vector<1x128xf32>
    %c9_105 = arith.constant 9 : index
    %c1_106 = arith.constant 1 : index
    %231 = memref.load %arg4[%c9_105, %c1_106] : memref<10x2xf32, #tpu.memory_space<smem>>
    %232 = vector.broadcast %231 : f32 to vector<1x128xf32>
    %233 = arith.mulf %232, %226 : vector<1x128xf32>
    %234 = arith.addf %211, %233 : vector<1x128xf32>
    %c0_107 = arith.constant 0 : index
    %235 = memref.load %arg5[%c0_107] : memref<2xf32, #tpu.memory_space<smem>>
    %236 = vector.broadcast %235 : f32 to vector<1x128xf32>
    %237 = arith.addf %230, %236 : vector<1x128xf32>
    %c0_108 = arith.constant 0 : index
    %c0_109 = arith.constant 0 : index
    %238 = vector.load %arg6[%c0_108, %c0_109] : memref<2x128xf32, #tpu.memory_space<vmem>>, vector<1x128xf32>
    tpu.vector_store %arg6[%c0_108, %c0_109], %237 {strides = array<i32>} : memref<2x128xf32, #tpu.memory_space<vmem>>, vector<1x128xf32>,
    %c1_110 = arith.constant 1 : index
    %239 = memref.load %arg5[%c1_110] : memref<2xf32, #tpu.memory_space<smem>>
    %240 = vector.broadcast %239 : f32 to vector<1x128xf32>
    %241 = arith.addf %234, %240 : vector<1x128xf32>
    %c1_111 = arith.constant 1 : index
    %c0_112 = arith.constant 0 : index
    %242 = vector.load %arg6[%c1_111, %c0_112] : memref<2x128xf32, #tpu.memory_space<vmem>>, vector<1x128xf32>
    tpu.vector_store %arg6[%c1_111, %c0_112], %241 {strides = array<i32>} : memref<2x128xf32, #tpu.memory_space<vmem>>, vector<1x128xf32>,
    return
  }
  func.func @transform_0(%arg0: i32) -> (i32, i32) {
    %c0_i32 = arith.constant 0 : i32
    %c0_i32_0 = arith.constant 0 : i32
    return %c0_i32, %arg0 : i32, i32
  }
  func.func @transform_1(%arg0: i32) -> (i32, i32) {
    %c0_i32 = arith.constant 0 : i32
    %c0_i32_0 = arith.constant 0 : i32
    %c0_i32_1 = arith.constant 0 : i32
    return %c0_i32, %c0_i32_0 : i32, i32
  }
  func.func @transform_2(%arg0: i32) -> i32 {
    %c0_i32 = arith.constant 0 : i32
    %c0_i32_0 = arith.constant 0 : i32
    return %c0_i32 : i32
  }
  func.func @transform_3(%arg0: i32) -> (i32, i32) {
    %c0_i32 = arith.constant 0 : i32
    %c0_i32_0 = arith.constant 0 : i32
    %c0_i32_1 = arith.constant 0 : i32
    return %c0_i32, %c0_i32_0 : i32, i32
  }
  func.func @transform_4(%arg0: i32) -> i32 {
    %c0_i32 = arith.constant 0 : i32
    %c0_i32_0 = arith.constant 0 : i32
    return %c0_i32 : i32
  }
  func.func @transform_5(%arg0: i32) -> (i32, i32) {
    %c0_i32 = arith.constant 0 : i32
    %c0_i32_0 = arith.constant 0 : i32
    return %c0_i32, %arg0 : i32, i32
  }
}

</mosaic_0001>

<llo_original>
// kernel: net_forward.1
$region0: #{net_forward.1}
  #allocation0 [shape = 'u32[]', space=smem, size = 0x4, offset = 0x4, fixed_abs, tag = 'smem constant byte address 0x4 - core index']
  #allocation1 [shape = 'u32[72,128]{1,0:T(1,128)}', space=vmem, size = 0x9000, scoped, tag = 'internal scratch']
  %s0 = inlined_call_operand.vmem [shape: f32[3,8], index: 0, kind: input, shape index: {}]
  %s1 = inlined_call_operand.vmem [shape: f32[3,10], index: 1, kind: input, shape index: {}]
  %s2 = inlined_call_operand.vmem [shape: f32[10], index: 2, kind: input, shape index: {}]
  %s3 = inlined_call_operand.vmem [shape: f32[10,2], index: 3, kind: input, shape index: {}]
  %s4 = inlined_call_operand.vmem [shape: f32[2], index: 4, kind: input, shape index: {}]
  %s5 = inlined_call_operand.hbm [shape: f32[2,8], index: 5, kind: output, shape index: {}]
  %s6 = sld [smem:[#allocation0]]
  $region46: #{net_forward.1} parent=0
    _
  %s8 = ssub.s32 1, %s6
  %s9 = scalar_select 0, %s8, %s6
  $region1: #{net_forward.1} parent=0
    #allocation2 [shape = 'u8[2048]{0}', space=smem, size = 0x800, scoped, tag = 'input window, operand 1, single buffered']
    #allocation3 [shape = 's32[1]{0}', space=sflag, size = 0x4, scoped, tag = 'scoped memory for net_forward.1']
    #allocation4 [shape = 's32[1]{0}', space=sflag, size = 0x4, scoped, tag = 'scoped memory for net_forward.1']
    #allocation5 [shape = 'u8[512]{0}', space=smem, size = 0x200, scoped, tag = 'input window, operand 2, single buffered']
    #allocation6 [shape = 's32[1]{0}', space=sflag, size = 0x4, scoped, tag = 'scoped memory for net_forward.1']
    #allocation7 [shape = 'u8[8192]{0}', space=smem, size = 0x2000, scoped, tag = 'input window, operand 3, single buffered']
    #allocation8 [shape = 'u8[512]{0}', space=smem, size = 0x200, scoped, tag = 'input window, operand 4, single buffered']
    #allocation9 [shape = 's32[1]{0}', space=sflag, size = 0x4, scoped, tag = 'scoped memory for net_forward.1']
    #allocation10 [shape = 'u8[1024]{0}', space=vmem, size = 0x400, scoped, tag = 'output window, operand 0, single buffered']
    %10 = vsyncpa [#allocation4], 0
    %11 = vsyncpa [#allocation6], 0
    %12 = vsyncpa [#allocation9], 0
    %13 = vsyncpa [#allocation3], 0
    // Predicated region
    $region2: #{net_forward.1} parent=1 // pred_check
      _
    $region3: #{net_forward.1} parent=1 // pred_check_branch
      %15 = sbr.rel (0) target = $region5
    $region4: #{net_forward.1} parent=1 // pred_region
      _
    $region5: #{net_forward.1} parent=1 // pred_fallthru
      _
    // Predicated region
    $region6: #{net_forward.1} parent=1 // pred_check
      _
    $region7: #{net_forward.1} parent=1 // pred_check_branch
      %17 = sbr.rel (0) target = $region9
    $region8: #{net_forward.1} parent=1 // pred_region
      %19 = vsyncadd [#allocation4], 0
      %s21 = sshll.u32 %s1, 4
      %s22 = int_to_ptr.vmem [resolvable:$true] %s21
      %24 = dma.vmem_to_smem %s22, 64, [#allocation2], [#allocation4]
    $region9: #{net_forward.1} parent=1 // pred_fallthru
      _
    // Predicated region
    $region10: #{net_forward.1} parent=1 // pred_check
      _
    $region11: #{net_forward.1} parent=1 // pred_check_branch
      %26 = sbr.rel (0) target = $region13
    $region12: #{net_forward.1} parent=1 // pred_region
      %28 = vsyncadd [#allocation6], 0
      %s30 = sshll.u32 %s2, 4
      %s31 = int_to_ptr.vmem [resolvable:$true] %s30
      %33 = dma.vmem_to_smem %s31, 16, [#allocation5], [#allocation6]
    $region13: #{net_forward.1} parent=1 // pred_fallthru
      _
    // Predicated region
    $region14: #{net_forward.1} parent=1 // pred_check
      _
    $region15: #{net_forward.1} parent=1 // pred_check_branch
      %35 = sbr.rel (0) target = $region17
    $region16: #{net_forward.1} parent=1 // pred_region
      %37 = vsyncadd [#allocation6], 0
      %s38 = sshll.u32 %s3, 4
      %s39 = int_to_ptr.vmem [resolvable:$true] %s38
      %44 = dma.vmem_to_smem %s39, 256, [#allocation7], [#allocation6], 128, 128, 8
    $region17: #{net_forward.1} parent=1 // pred_fallthru
      _
    // Predicated region
    $region18: #{net_forward.1} parent=1 // pred_check
      _
    $region19: #{net_forward.1} parent=1 // pred_check_branch
      %46 = sbr.rel (0) target = $region21
    $region20: #{net_forward.1} parent=1 // pred_region
      %48 = vsyncadd [#allocation9], 0
      %s50 = sshll.u32 %s4, 4
      %s51 = int_to_ptr.vmem [resolvable:$true] %s50
      %53 = dma.vmem_to_smem %s51, 16, [#allocation8], [#allocation9]
    $region21: #{net_forward.1} parent=1 // pred_fallthru
      _
    // Predicated region
    $region22: #{net_forward.1} parent=1 // pred_check
      _
    $region23: #{net_forward.1} parent=1 // pred_check_branch
      %55 = sbr.rel (0) target = $region25
    $region24: #{net_forward.1} parent=1 // pred_region
      %57 = dma.done [#allocation4], 64
    $region25: #{net_forward.1} parent=1 // pred_fallthru
      _
    // Predicated region
    $region26: #{net_forward.1} parent=1 // pred_check
      _
    $region27: #{net_forward.1} parent=1 // pred_check_branch
      %59 = sbr.rel (0) target = $region29
    $region28: #{net_forward.1} parent=1 // pred_region
      %61 = dma.done [#allocation6], 16
    $region29: #{net_forward.1} parent=1 // pred_fallthru
      _
    // Predicated region
    $region30: #{net_forward.1} parent=1 // pred_check
      _
    $region31: #{net_forward.1} parent=1 // pred_check_branch
      %63 = sbr.rel (0) target = $region33
    $region32: #{net_forward.1} parent=1 // pred_region
      %65 = dma.done [#allocation6], 256
    $region33: #{net_forward.1} parent=1 // pred_fallthru
      _
    // Predicated region
    $region34: #{net_forward.1} parent=1 // pred_check
      _
    $region35: #{net_forward.1} parent=1 // pred_check_branch
      %67 = sbr.rel (0) target = $region37
    $region36: #{net_forward.1} parent=1 // pred_region
      %69 = dma.done [#allocation9], 16
    $region37: #{net_forward.1} parent=1 // pred_fallthru
      _
    %70 = sfence
    %v71 = vld [vmem:[%s0] sm:$0x1]
    %v72 = vld [vmem:[%s0 + $0x1] sm:$0x1]
    %v73 = vld [vmem:[%s0 + $0x2] sm:$0x1]
    %s74 = sld [smem:[#allocation2]]
    %v75 = vstv %s74
    %v76 = vmul.f32 %v75, %v71
    %s77 = sld [smem:[#allocation2 + $0x80]]
    %v78 = vstv %s77
    %v79 = vmul.f32 %v78, %v72
    %v80 = vadd.f32 %v76, %v79
    %s81 = sld [smem:[#allocation2 + $0x100]]
    %v82 = vstv %s81
    %v83 = vmul.f32 %v82, %v73
    %v84 = vadd.f32 %v80, %v83
    %s85 = sld [smem:[#allocation5]]
    %v86 = vstv %s85
    %v87 = vadd.f32 %v84, %v86
    %v88 = vtanh.pop %v87
    %s89 = sld [smem:[#allocation7]]
    %v90 = vstv %s89
    %v91 = vmul.f32 %v90, %v88
    %v92 = vadd.f32 %v91, 0.0
    %s93 = sld [smem:[#allocation7 + $0x1]]
    %v94 = vstv %s93
    %v95 = vmul.f32 %v94, %v88
    %v96 = vadd.f32 %v95, 0.0
    %s97 = sld [smem:[#allocation2 + $0x1]]
    %v98 = vstv %s97
    %v99 = vmul.f32 %v98, %v71
    %s100 = sld [smem:[#allocation2 + $0x81]]
    %v101 = vstv %s100
    %v102 = vmul.f32 %v101, %v72
    %v103 = vadd.f32 %v99, %v102
    %s104 = sld [smem:[#allocation2 + $0x101]]
    %v105 = vstv %s104
    %v106 = vmul.f32 %v105, %v73
    %v107 = vadd.f32 %v103, %v106
    %s108 = sld [smem:[#allocation5 + $0x1]]
    %v109 = vstv %s108
    %v110 = vadd.f32 %v107, %v109
    %v111 = vtanh.pop %v110
    %s112 = sld [smem:[#allocation7 + $0x80]]
    %v113 = vstv %s112
    %v114 = vmul.f32 %v113, %v111
    %v115 = vadd.f32 %v92, %v114
    %s116 = sld [smem:[#allocation7 + $0x81]]
    %v117 = vstv %s116
    %v118 = vmul.f32 %v117, %v111
    %v119 = vadd.f32 %v96, %v118
    %s120 = sld [smem:[#allocation2 + $0x2]]
    %v121 = vstv %s120
    %v122 = vmul.f32 %v121, %v71
    %s123 = sld [smem:[#allocation2 + $0x82]]
    %v124 = vstv %s123
    %v125 = vmul.f32 %v124, %v72
    %v126 = vadd.f32 %v122, %v125
    %s127 = sld [smem:[#allocation2 + $0x102]]
    %v128 = vstv %s127
    %v129 = vmul.f32 %v128, %v73
    %v130 = vadd.f32 %v126, %v129
    %s131 = sld [smem:[#allocation5 + $0x2]]
    %v132 = vstv %s131
    %v133 = vadd.f32 %v130, %v132
    %v134 = vtanh.pop %v133
    %s135 = sld [smem:[#allocation7 + $0x100]]
    %v136 = vstv %s135
    %v137 = vmul.f32 %v136, %v134
    %v138 = vadd.f32 %v115, %v137
    %s139 = sld [smem:[#allocation7 + $0x101]]
    %v140 = vstv %s139
    %v141 = vmul.f32 %v140, %v134
    %v142 = vadd.f32 %v119, %v141
    %s143 = sld [smem:[#allocation2 + $0x3]]
    %v144 = vstv %s143
    %v145 = vmul.f32 %v144, %v71
    %s146 = sld [smem:[#allocation2 + $0x83]]
    %v147 = vstv %s146
    %v148 = vmul.f32 %v147, %v72
    %v149 = vadd.f32 %v145, %v148
    %s150 = sld [smem:[#allocation2 + $0x103]]
    %v151 = vstv %s150
    %v152 = vmul.f32 %v151, %v73
    %v153 = vadd.f32 %v149, %v152
    %s154 = sld [smem:[#allocation5 + $0x3]]
    %v155 = vstv %s154
    %v156 = vadd.f32 %v153, %v155
    %v157 = vtanh.pop %v156
    %s158 = sld [smem:[#allocation7 + $0x180]]
    %v159 = vstv %s158
    %v160 = vmul.f32 %v159, %v157
    %v161 = vadd.f32 %v138, %v160
    %s162 = sld [smem:[#allocation7 + $0x181]]
    %v163 = vstv %s162
    %v164 = vmul.f32 %v163, %v157
    %v165 = vadd.f32 %v142, %v164
    %s166 = sld [smem:[#allocation2 + $0x4]]
    %v167 = vstv %s166
    %v168 = vmul.f32 %v167, %v71
    %s169 = sld [smem:[#allocation2 + $0x84]]
    %v170 = vstv %s169
    %v171 = vmul.f32 %v170, %v72
    %v172 = vadd.f32 %v168, %v171
    %s173 = sld [smem:[#allocation2 + $0x104]]
    %v174 = vstv %s173
    %v175 = vmul.f32 %v174, %v73
    %v176 = vadd.f32 %v172, %v175
    %s177 = sld [smem:[#allocation5 + $0x4]]
    %v178 = vstv %s177
    %v179 = vadd.f32 %v176, %v178
    %v180 = vtanh.pop %v179
    %s181 = sld [smem:[#allocation7 + $0x200]]
    %v182 = vstv %s181
    %v183 = vmul.f32 %v182, %v180
    %v184 = vadd.f32 %v161, %v183
    %s185 = sld [smem:[#allocation7 + $0x201]]
    %v186 = vstv %s185
    %v187 = vmul.f32 %v186, %v180
    %v188 = vadd.f32 %v165, %v187
    %s189 = sld [smem:[#allocation2 + $0x5]]
    %v190 = vstv %s189
    %v191 = vmul.f32 %v190, %v71
    %s192 = sld [smem:[#allocation2 + $0x85]]
    %v193 = vstv %s192
    %v194 = vmul.f32 %v193, %v72
    %v195 = vadd.f32 %v191, %v194
    %s196 = sld [smem:[#allocation2 + $0x105]]
    %v197 = vstv %s196
    %v198 = vmul.f32 %v197, %v73
    %v199 = vadd.f32 %v195, %v198
    %s200 = sld [smem:[#allocation5 + $0x5]]
    %v201 = vstv %s200
    %v202 = vadd.f32 %v199, %v201
    %v203 = vtanh.pop %v202
    %s204 = sld [smem:[#allocation7 + $0x280]]
    %v205 = vstv %s204
    %v206 = vmul.f32 %v205, %v203
    %v207 = vadd.f32 %v184, %v206
    %s208 = sld [smem:[#allocation7 + $0x281]]
    %v209 = vstv %s208
    %v210 = vmul.f32 %v209, %v203
    %v211 = vadd.f32 %v188, %v210
    %s212 = sld [smem:[#allocation2 + $0x6]]
    %v213 = vstv %s212
    %v214 = vmul.f32 %v213, %v71
    %s215 = sld [smem:[#allocation2 + $0x86]]
    %v216 = vstv %s215
    %v217 = vmul.f32 %v216, %v72
    %v218 = vadd.f32 %v214, %v217
    %s219 = sld [smem:[#allocation2 + $0x106]]
    %v220 = vstv %s219
    %v221 = vmul.f32 %v220, %v73
    %v222 = vadd.f32 %v218, %v221
    %s223 = sld [smem:[#allocation5 + $0x6]]
    %v224 = vstv %s223
    %v225 = vadd.f32 %v222, %v224
    %v226 = vtanh.pop %v225
    %s227 = sld [smem:[#allocation7 + $0x300]]
    %v228 = vstv %s227
    %v229 = vmul.f32 %v228, %v226
    %v230 = vadd.f32 %v207, %v229
    %s231 = sld [smem:[#allocation7 + $0x301]]
    %v232 = vstv %s231
    %v233 = vmul.f32 %v232, %v226
    %v234 = vadd.f32 %v211, %v233
    %s235 = sld [smem:[#allocation2 + $0x7]]
    %v236 = vstv %s235
    %v237 = vmul.f32 %v236, %v71
    %s238 = sld [smem:[#allocation2 + $0x87]]
    %v239 = vstv %s238
    %v240 = vmul.f32 %v239, %v72
    %v241 = vadd.f32 %v237, %v240
    %s242 = sld [smem:[#allocation2 + $0x107]]
    %v243 = vstv %s242
    %v244 = vmul.f32 %v243, %v73
    %v245 = vadd.f32 %v241, %v244
    %s246 = sld [smem:[#allocation5 + $0x7]]
    %v247 = vstv %s246
    %v248 = vadd.f32 %v245, %v247
    %v249 = vtanh.pop %v248
    %s250 = sld [smem:[#allocation7 + $0x380]]
    %v251 = vstv %s250
    %v252 = vmul.f32 %v251, %v249
    %v253 = vadd.f32 %v230, %v252
    %s254 = sld [smem:[#allocation7 + $0x381]]
    %v255 = vstv %s254
    %v256 = vmul.f32 %v255, %v249
    %v257 = vadd.f32 %v234, %v256
    %s258 = sld [smem:[#allocation2 + $0x8]]
    %v259 = vstv %s258
    %v260 = vmul.f32 %v259, %v71
    %s261 = sld [smem:[#allocation2 + $0x88]]
    %v262 = vstv %s261
    %v263 = vmul.f32 %v262, %v72
    %v264 = vadd.f32 %v260, %v263
    %s265 = sld [smem:[#allocation2 + $0x108]]
    %v266 = vstv %s265
    %v267 = vmul.f32 %v266, %v73
    %v268 = vadd.f32 %v264, %v267
    %s269 = sld [smem:[#allocation5 + $0x8]]
    %v270 = vstv %s269
    %v271 = vadd.f32 %v268, %v270
    %v272 = vtanh.pop %v271
    %s273 = sld [smem:[#allocation7 + $0x400]]
    %v274 = vstv %s273
    %v275 = vmul.f32 %v274, %v272
    %v276 = vadd.f32 %v253, %v275
    %s277 = sld [smem:[#allocation7 + $0x401]]
    %v278 = vstv %s277
    %v279 = vmul.f32 %v278, %v272
    %v280 = vadd.f32 %v257, %v279
    %s281 = sld [smem:[#allocation2 + $0x9]]
    %v282 = vstv %s281
    %v283 = vmul.f32 %v282, %v71
    %s284 = sld [smem:[#allocation2 + $0x89]]
    %v285 = vstv %s284
    %v286 = vmul.f32 %v285, %v72
    %v287 = vadd.f32 %v283, %v286
    %s288 = sld [smem:[#allocation2 + $0x109]]
    %v289 = vstv %s288
    %v290 = vmul.f32 %v289, %v73
    %v291 = vadd.f32 %v287, %v290
    %s292 = sld [smem:[#allocation5 + $0x9]]
    %v293 = vstv %s292
    %v294 = vadd.f32 %v291, %v293
    %v295 = vtanh.pop %v294
    %s296 = sld [smem:[#allocation7 + $0x480]]
    %v297 = vstv %s296
    %v298 = vmul.f32 %v297, %v295
    %v299 = vadd.f32 %v276, %v298
    %s300 = sld [smem:[#allocation7 + $0x481]]
    %v301 = vstv %s300
    %v302 = vmul.f32 %v301, %v295
    %v303 = vadd.f32 %v280, %v302
    %s304 = sld [smem:[#allocation8]]
    %v305 = vstv %s304
    %v306 = vadd.f32 %v299, %v305
    %307 = vst [vmem:[#allocation10] sm:$0x1] %v306
    %s308 = sld [smem:[#allocation8 + $0x1]]
    %v309 = vstv %s308
    %v310 = vadd.f32 %v303, %v309
    %311 = vst [vmem:[#allocation10 + $0x1] sm:$0x1] %v310
    // Predicated region
    $region38: #{net_forward.1} parent=1 // pred_check
      _
    $region39: #{net_forward.1} parent=1 // pred_check_branch
      %313 = sbr.rel (0) target = $region41
    $region40: #{net_forward.1} parent=1 // pred_region
      %315 = vsyncadd [#allocation3], 0
      %s317 = sshll.u32 [#allocation10], 4
      %s318 = int_to_ptr.vmem [resolvable:$true] %s317
      %s319 = sshll.u32 %s5, 4
      %s320 = int_to_ptr.hbm [resolvable:$true] %s319
      %322 = dma.vmem_to_hbm [thread:$0]  %s318, 32, %s320, [#allocation3]
    $region41: #{net_forward.1} parent=1 // pred_fallthru
      _
    // Predicated region
    $region42: #{net_forward.1} parent=1 // pred_check
      _
    $region43: #{net_forward.1} parent=1 // pred_check_branch
      %324 = sbr.rel (0) target = $region45
    $region44: #{net_forward.1} parent=1 // pred_region
      %326 = dma.done [#allocation3], 32
    $region45: #{net_forward.1} parent=1 // pred_fallthru
      _
    %327 = vsyncpa [#allocation3], 1
    %328 = vsyncpa [#allocation4], 1
    %329 = vsyncpa [#allocation6], 1
    %330 = vsyncpa [#allocation9], 1

</llo_original>
